<compile_context>
chip_gen: v7x
topology: tpu7x:2x2x1
jax: 0.10.0
libtpu: 0.0.40
codegen_flags: <defaults>
</compile_context>

<pallas_src>
import functools
import math

import numpy as np
import jax
import jax.numpy as jnp
from jax.experimental import pallas as pl
from jax.experimental.pallas import tpu as pltpu


# ----------------------------------------------------------------------------
# Host-side (numpy, cached) 1-D bilinear interpolation matrices
# ----------------------------------------------------------------------------
@functools.lru_cache(maxsize=None)
def _bilinear_matrix_np(in_size: int, out_size: int, scale_factor: float,
                        align_corners: bool = False) -> np.ndarray:
    """(out_size, in_size) matrix matching torch.nn.functional.interpolate
    (mode='bilinear', align_corners=False, recompute_scale_factor=False)
    along one spatial axis."""
    dst = np.arange(out_size, dtype=np.float64)
    if align_corners and out_size > 1:
        src = dst * ((in_size - 1) / (out_size - 1))
    else:
        src = (dst + 0.5) / scale_factor - 0.5
        src = np.maximum(src, 0.0)
    i0 = np.clip(np.floor(src).astype(np.int64), 0, in_size - 1)
    i1 = np.clip(i0 + 1, 0, in_size - 1)
    w1 = src - i0
    w0 = 1.0 - w1
    mat = np.zeros((out_size, in_size), dtype=np.float64)
    rows = np.arange(out_size)
    np.add.at(mat, (rows, i0), w0)
    np.add.at(mat, (rows, i1), w1)
    return mat.astype(np.float32)


def _choose_tb(nc: int, per_plane_f32_elems: int,
               vmem_budget_bytes: int = 8 << 20) -> int:
    """Pick the plane-block size TB (a divisor of nc).

    Largest divisor whose double-buffered per-step working set fits the VMEM
    budget; if that would collapse the grid to a single step, prefer the
    largest divisor that still gives >= 2 steps so the grid axis can be split
    across v7x's two TensorCores ("parallel" semantics)."""
    divisors = [d for d in range(1, nc + 1) if nc % d == 0]
    fits = [d for d in divisors if 2 * d * per_plane_f32_elems * 4 <= vmem_budget_bytes]
    if not fits:
        return 1
    best = max(fits)
    if nc // best < 2:
        multi = [d for d in fits if nc // d >= 2]
        if multi:
            best = max(multi)
    return best


# ----------------------------------------------------------------------------
# Fused pyramid kernel: one grid step processes TB (n,c) planes for ALL levels
# ----------------------------------------------------------------------------
def _make_pyramid_kernel(n_levels: int):
    def kernel(*refs):
        x_ref = refs[0]                              # (TB, H, W)
        w_refs = refs[1:1 + 2 * n_levels]            # wh_l (Hout,H), wwT_l (W,Wout)
        o_refs = refs[1 + 2 * n_levels:]             # (TB, Hout_l, Wout_l)

        x = x_ref[...].astype(jnp.float32)           # all math in f32
        tb, h, w = x.shape
        collapse = (h % 8) == 0                      # sublane-aligned -> free reshape
        if collapse:
            x2 = x.reshape(tb * h, w)                # (TB*H, W)

        for lvl in range(n_levels):
            wh = w_refs[2 * lvl][...]                # (Hout, H)
            wwt = w_refs[2 * lvl + 1][...]           # (W, Wout)  pre-transposed on host
            o_ref = o_refs[lvl]
            hout = wh.shape[0]
            wout = wwt.shape[1]

            # ---- width pass: contraction over W (lane dim), single big MXU matmul
            if collapse:
                t = jnp.dot(x2, wwt, preferred_element_type=jnp.float32)   # (TB*H, Wout)
                t = t.reshape(tb, h, wout)
            else:
                # fallback: no leading-dim collapse (avoids layout copy)
                t = jax.lax.dot_general(
                    x, wwt,
                    dimension_numbers=(((2,), (0,)), ((), ())),
                    preferred_element_type=jnp.float32)                    # (TB, H, Wout)

            # ---- height pass: batched matmul, no in-kernel transpose
            wh_b = jnp.broadcast_to(wh, (tb, hout, h))
            o = jax.lax.dot_general(
                wh_b, t,
                dimension_numbers=(((2,), (1,)), ((0,), (0,))),
                preferred_element_type=jnp.float32)                        # (TB, Hout, Wout)

            o_ref[...] = o.astype(o_ref.dtype)
    return kernel


def scale_pyramid(x_nchw: jnp.ndarray, scales, *, align_corners: bool = False):
    """JAX/Pallas equivalent of ScalePyramid.forward -> dict of levels."""
    n, c, h, w = x_nchw.shape
    nc = n * c
    xf = x_nchw.reshape(nc, h, w)

    # Levels that actually resample (dedup; scale == 1.0 is a passthrough).
    compute_scales = []
    for s in scales:
        s = float(s)
        if s != 1.0 and s not in compute_scales:
            compute_scales.append(s)

    results = {}
    if compute_scales:
        whs, wwts, out_hw = [], [], []
        per_plane = h * w
        weights_elems = 0
        for s in compute_scales:
            hout = int(math.floor(h * s))
            wout = int(math.floor(w * s))
            wh = _bilinear_matrix_np(h, hout, s, align_corners)              # (Hout, H)
            wwt = np.ascontiguousarray(
                _bilinear_matrix_np(w, wout, s, align_corners).T)            # (W, Wout)
            whs.append(jnp.asarray(wh))
            wwts.append(jnp.asarray(wwt))
            out_hw.append((hout, wout))
            # per-plane working set: width-pass intermediate + output + broadcast wh
            per_plane += h * wout + hout * wout + hout * h
            weights_elems += hout * h + w * wout

        vmem_budget = (8 << 20) - 4 * weights_elems          # weights stay resident
        tb = _choose_tb(nc, per_plane, max(vmem_budget, 1 << 20))
        grid = (nc // tb,)

        in_specs = [pl.BlockSpec((tb, h, w), lambda i: (i, 0, 0))]
        out_specs = []
        out_shape = []
        operands = [xf]
        for (hout, wout), wh, wwt in zip(out_hw, whs, wwts):
            # constant index_map -> weights fetched once, kept resident in VMEM
            in_specs.append(pl.BlockSpec((hout, h), lambda i: (0, 0)))
            in_specs.append(pl.BlockSpec((w, wout), lambda i: (0, 0)))
            operands.extend([wh, wwt])
            out_specs.append(pl.BlockSpec((tb, hout, wout), lambda i: (i, 0, 0)))
            out_shape.append(jax.ShapeDtypeStruct((nc, hout, wout), x_nchw.dtype))

        ys = pl.pallas_call(
            _make_pyramid_kernel(len(compute_scales)),
            out_shape=out_shape,
            grid=grid,
            in_specs=in_specs,
            out_specs=out_specs,
            compiler_params=pltpu.CompilerParams(
                dimension_semantics=("parallel",)),
        )(*operands)
        if not isinstance(ys, (list, tuple)):
            ys = [ys]
        for s, (hout, wout), y in zip(compute_scales, out_hw, ys):
            results[s] = y.reshape(n, c, hout, wout)

    out = {}
    for i, s in enumerate(scales, start=1):
        s = float(s)
        if s == 1.0:
            out[f"level_{i}"] = x_nchw          # bit-exact identity, zero cost
        else:
            out[f"level_{i}"] = results[s]
    return out


if __name__ == "__main__":
    # ScalePyramid has no learned parameters; only the deterministic bilinear
    # interpolation matrices are constructed in-script.
    scales = [0.5, 1.0, 2.0]

    key = jax.random.PRNGKey(0)
    x = jax.random.normal(key, (2, 4, 16, 16), dtype=jnp.float32)  # NCHW

    pyr = scale_pyramid(x, scales)
    pyr = jax.block_until_ready(pyr)

    # Output sizes match torch.nn.functional.interpolate.
    assert pyr["level_1"].shape == (2, 4, 8, 8)
    assert pyr["level_2"].shape == (2, 4, 16, 16)
    assert pyr["level_3"].shape == (2, 4, 32, 32)

    # scale == 1.0 is a bit-exact passthrough.
    assert bool(jnp.array_equal(pyr["level_2"], x))

    # Cross-check resampled levels against a pure-JAX separable reference.
    def _ref_resize(xx, s):
        hh, ww = xx.shape[-2:]
        ho, wo = int(math.floor(hh * s)), int(math.floor(ww * s))
        wh = jnp.asarray(_bilinear_matrix_np(hh, ho, s))
        wwm = jnp.asarray(_bilinear_matrix_np(ww, wo, s))
        return jnp.einsum("oh,nchw,pw->ncop", wh, xx, wwm)

    for lvl, s in (("level_1", 0.5), ("level_3", 2.0)):
        ref = _ref_resize(x, s)
        assert bool(jnp.allclose(pyr[lvl], ref, atol=1e-5, rtol=1e-5))

    # TODO(synk): non-bilinear modes (nearest/bicubic/area/trilinear) and the
    # `sizes` / preserve_aspect_ratio config paths of Interpolate are not
    # implemented; module defaults (bilinear + scale factors) are covered.
    print("KERNEL_OK")
</pallas_src>

<mosaic_0001>
module attributes {stable_mosaic.version = 11 : i64} {
  func.func @kernel(%arg0: i32, %arg1: memref<4x16x16xf32, #tpu.memory_space<vmem>>, %arg2: memref<8x16xf32, #tpu.memory_space<vmem>>, %arg3: memref<16x8xf32, #tpu.memory_space<vmem>>, %arg4: memref<32x16xf32, #tpu.memory_space<vmem>>, %arg5: memref<16x32xf32, #tpu.memory_space<vmem>>, %arg6: memref<4x8x8xf32, #tpu.memory_space<vmem>>, %arg7: memref<4x32x32xf32, #tpu.memory_space<vmem>>) attributes {dimension_semantics = [#tpu.dimension_semantics<parallel>], iteration_bounds = array<i64: 2>, scalar_prefetch = 0 : i64, scratch_operands = 0 : i64, tpu.core_type = #tpu.core_type<tc>, window_params = [{transform_indices = @transform_0, window_bounds = array<i64: 4, 16, 16>}, {pipeline_mode = #tpu.pipeline_mode<synchronous>, transform_indices = @transform_1, window_bounds = array<i64: 8, 16>}, {pipeline_mode = #tpu.pipeline_mode<synchronous>, transform_indices = @transform_2, window_bounds = array<i64: 16, 8>}, {pipeline_mode = #tpu.pipeline_mode<synchronous>, transform_indices = @transform_3, window_bounds = array<i64: 32, 16>}, {pipeline_mode = #tpu.pipeline_mode<synchronous>, transform_indices = @transform_4, window_bounds = array<i64: 16, 32>}, {transform_indices = @transform_5, window_bounds = array<i64: 4, 8, 8>}, {transform_indices = @transform_6, window_bounds = array<i64: 4, 32, 32>}]} {
    %c0 = arith.constant 0 : index
    %c0_0 = arith.constant 0 : index
    %c0_1 = arith.constant 0 : index
    %0 = vector.load %arg1[%c0, %c0_0, %c0_1] : memref<4x16x16xf32, #tpu.memory_space<vmem>>, vector<4x16x16xf32>
    %1 = vector.shape_cast %0 : vector<4x16x16xf32> to vector<64x16xf32>
    %c0_2 = arith.constant 0 : index
    %c0_3 = arith.constant 0 : index
    %2 = vector.load %arg2[%c0_2, %c0_3] : memref<8x16xf32, #tpu.memory_space<vmem>>, vector<8x16xf32>
    %c0_4 = arith.constant 0 : index
    %c0_5 = arith.constant 0 : index
    %3 = vector.load %arg3[%c0_4, %c0_5] : memref<16x8xf32, #tpu.memory_space<vmem>>, vector<16x8xf32>
    %cst = arith.constant dense<0.000000e+00> : vector<64x8xf32>
    %4 = tpu.matmul %1, %3, %cst {dimension_numbers = #tpu.dot_dimension_numbers<[1], [0], [0], [1], [0, 0, 1, 1], [], []>} : vector<64x16xf32>, vector<16x8xf32>, vector<64x8xf32> -> vector<64x8xf32>
    %5 = vector.shape_cast %4 : vector<64x8xf32> to vector<4x16x8xf32>
    %6 = vector.shape_cast %2 : vector<8x16xf32> to vector<1x8x16xf32>
    %7 = vector.broadcast %6 : vector<1x8x16xf32> to vector<4x8x16xf32>
    %cst_6 = arith.constant dense<0.000000e+00> : vector<4x8x8xf32>
    %8 = tpu.matmul %7, %5, %cst_6 {dimension_numbers = #tpu.dot_dimension_numbers<[2], [1], [1], [2], [0, 0, 0, 1, 1, 2], [0], [0]>} : vector<4x8x16xf32>, vector<4x16x8xf32>, vector<4x8x8xf32> -> vector<4x8x8xf32>
    %c0_7 = arith.constant 0 : index
    %c0_8 = arith.constant 0 : index
    %c0_9 = arith.constant 0 : index
    %9 = vector.load %arg6[%c0_7, %c0_8, %c0_9] : memref<4x8x8xf32, #tpu.memory_space<vmem>>, vector<4x8x8xf32>
    tpu.vector_store %arg6[%c0_7, %c0_8, %c0_9], %8 {strides = array<i32>} : memref<4x8x8xf32, #tpu.memory_space<vmem>>, vector<4x8x8xf32>,
    %c0_10 = arith.constant 0 : index
    %c0_11 = arith.constant 0 : index
    %10 = vector.load %arg4[%c0_10, %c0_11] : memref<32x16xf32, #tpu.memory_space<vmem>>, vector<32x16xf32>
    %c0_12 = arith.constant 0 : index
    %c0_13 = arith.constant 0 : index
    %11 = vector.load %arg5[%c0_12, %c0_13] : memref<16x32xf32, #tpu.memory_space<vmem>>, vector<16x32xf32>
    %cst_14 = arith.constant dense<0.000000e+00> : vector<64x32xf32>
    %12 = tpu.matmul %1, %11, %cst_14 {dimension_numbers = #tpu.dot_dimension_numbers<[1], [0], [0], [1], [0, 0, 1, 1], [], []>} : vector<64x16xf32>, vector<16x32xf32>, vector<64x32xf32> -> vector<64x32xf32>
    %13 = vector.shape_cast %12 : vector<64x32xf32> to vector<4x16x32xf32>
    %14 = vector.shape_cast %10 : vector<32x16xf32> to vector<1x32x16xf32>
    %15 = vector.broadcast %14 : vector<1x32x16xf32> to vector<4x32x16xf32>
    %cst_15 = arith.constant dense<0.000000e+00> : vector<4x32x32xf32>
    %16 = tpu.matmul %15, %13, %cst_15 {dimension_numbers = #tpu.dot_dimension_numbers<[2], [1], [1], [2], [0, 0, 0, 1, 1, 2], [0], [0]>} : vector<4x32x16xf32>, vector<4x16x32xf32>, vector<4x32x32xf32> -> vector<4x32x32xf32>
    %c0_16 = arith.constant 0 : index
    %c0_17 = arith.constant 0 : index
    %c0_18 = arith.constant 0 : index
    %17 = vector.load %arg7[%c0_16, %c0_17, %c0_18] : memref<4x32x32xf32, #tpu.memory_space<vmem>>, vector<4x32x32xf32>
    tpu.vector_store %arg7[%c0_16, %c0_17, %c0_18], %16 {strides = array<i32>} : memref<4x32x32xf32, #tpu.memory_space<vmem>>, vector<4x32x32xf32>,
    return
  }
  func.func @transform_0(%arg0: i32) -> (i32, i32, i32) {
    %c0_i32 = arith.constant 0 : i32
    %c0_i32_0 = arith.constant 0 : i32
    %c0_i32_1 = arith.constant 0 : i32
    return %arg0, %c0_i32, %c0_i32_0 : i32, i32, i32
  }
  func.func @transform_1(%arg0: i32) -> (i32, i32) {
    %c0_i32 = arith.constant 0 : i32
    %c0_i32_0 = arith.constant 0 : i32
    %c0_i32_1 = arith.constant 0 : i32
    return %c0_i32, %c0_i32_0 : i32, i32
  }
  func.func @transform_2(%arg0: i32) -> (i32, i32) {
    %c0_i32 = arith.constant 0 : i32
    %c0_i32_0 = arith.constant 0 : i32
    %c0_i32_1 = arith.constant 0 : i32
    return %c0_i32, %c0_i32_0 : i32, i32
  }
  func.func @transform_3(%arg0: i32) -> (i32, i32) {
    %c0_i32 = arith.constant 0 : i32
    %c0_i32_0 = arith.constant 0 : i32
    %c0_i32_1 = arith.constant 0 : i32
    return %c0_i32, %c0_i32_0 : i32, i32
  }
  func.func @transform_4(%arg0: i32) -> (i32, i32) {
    %c0_i32 = arith.constant 0 : i32
    %c0_i32_0 = arith.constant 0 : i32
    %c0_i32_1 = arith.constant 0 : i32
    return %c0_i32, %c0_i32_0 : i32, i32
  }
  func.func @transform_5(%arg0: i32) -> (i32, i32, i32) {
    %c0_i32 = arith.constant 0 : i32
    %c0_i32_0 = arith.constant 0 : i32
    %c0_i32_1 = arith.constant 0 : i32
    return %arg0, %c0_i32, %c0_i32_0 : i32, i32, i32
  }
  func.func @transform_6(%arg0: i32) -> (i32, i32, i32) {
    %c0_i32 = arith.constant 0 : i32
    %c0_i32_0 = arith.constant 0 : i32
    %c0_i32_1 = arith.constant 0 : i32
    return %arg0, %c0_i32, %c0_i32_0 : i32, i32, i32
  }
}

</mosaic_0001>

<llo_original>
// kernel: tpu_custom_call.1
$region0: #{tpu_custom_call.1}
  #allocation0 [shape = 'u32[]', space=smem, size = 0x4, offset = 0x4, fixed_abs, tag = 'smem constant byte address 0x4 - core index']
  #allocation1 [shape = 'u32[144,128]{1,0:T(1,128)}', space=vmem, size = 0x12000, scoped, tag = 'internal scratch']
  %s0 = inlined_call_operand.hbm [shape: f32[8,16,16], index: 0, kind: input, shape index: {}]
  %s1 = inlined_call_operand.vmem [shape: f32[8,16], index: 1, kind: input, shape index: {}]
  %s2 = inlined_call_operand.vmem [shape: f32[16,8], index: 2, kind: input, shape index: {}]
  %s3 = inlined_call_operand.vmem [shape: f32[32,16], index: 3, kind: input, shape index: {}]
  %s4 = inlined_call_operand.vmem [shape: f32[16,32], index: 4, kind: input, shape index: {}]
  %s5 = inlined_call_operand.hbm [shape: f32[8,8,8], index: 5, kind: output, shape index: {0}]
  %s6 = inlined_call_operand.hbm [shape: f32[8,32,32], index: 6, kind: output, shape index: {1}]
  %7 = xla_tuple %s5, %s6
  %s8 = sld [smem:[#allocation0]]
  $region65: #{tpu_custom_call.1} parent=0
    _
  %s10 = ssub.s32 1, %s8
  %s11 = scalar_select 0, %s10, %s8
  $region1: #{tpu_custom_call.1} parent=0
    #allocation2 [shape = 'u8[65536]{0}', space=vmem, size = 0x10000, scoped, tag = 'input window, operand 0']
    #allocation3 [shape = 's32[2]{0}', space=sflag, size = 0x8, scoped, tag = 'scoped memory for tpu_custom_call.1']
    #allocation4 [shape = 's32[2]{0}', space=sflag, size = 0x8, scoped, tag = 'scoped memory for tpu_custom_call.1']
    #allocation5 [shape = 'u8[32768]{0}', space=vmem, size = 0x8000, scoped, tag = 'output window, operand 0']
    #allocation6 [shape = 'u8[131072]{0}', space=vmem, size = 0x20000, scoped, tag = 'output window, operand 1']
    #allocation7 [shape = 's32[2]{0}', space=sflag, size = 0x8, scoped, tag = 'scoped memory for tpu_custom_call.1']
    %12 = vsyncpa [#allocation3], 0
    %s13 = scalar_lea.sflag [#allocation3], 1
    %14 = vsyncpa %s13, 0
    %15 = vsyncpa [#allocation4], 0
    %s16 = scalar_lea.sflag [#allocation4], 1
    %17 = vsyncpa %s16, 0
    %18 = vsyncpa [#allocation7], 0
    %s19 = scalar_lea.sflag [#allocation7], 1
    %20 = vsyncpa %s19, 0
    loop: start=0, step=1, limit=4
    $region2: #{tpu_custom_call.1} parent=1 // loop_pre_header
      _
    $region3: #{tpu_custom_call.1} parent=1 // loop_header
      %s22 = sphi 0, %s26
      %p23 = scmp.ge.s32.totalorder %s22, 4
      %s32 = sphi 0, %s34
      %s35 = sphi 0, %s32
      %s36 = sphi 0, %s35
      %s52 = sphi 0, %s36
      %s56 = sphi 0, %s56
      %s58 = sphi 0, %s56
      %s59 = sphi 0, %s58
      %s73 = sphi 0, %s59
      %s77 = sphi 0, %s77
      %s79 = sphi 0, %s77
      %s80 = sphi 0, %s79
      %s94 = sphi 0, %s80
      %s98 = sphi 0, %s98
      %s100 = sphi 0, %s98
      %s101 = sphi 0, %s100
      %s115 = sphi 0, %s101
      %s119 = sphi 0, %s119
      %s121 = sphi 0, %s119
      %s122 = sphi 0, %s121
      %s136 = sphi 0, %s122
      %s142 = sphi 0, %s144
      %s145 = sphi 0, %s142
      %s146 = sphi 0, %s145
      %s162 = sphi 0, %s146
      %s168 = sphi 0, %s170
      %s171 = sphi 0, %s168
      %s172 = sphi 0, %s171
      %s188 = sphi 0, %s172
    $region4: #{tpu_custom_call.1} parent=1 // loop_header_branch
      %25 = sbr.rel (%p23) target = $region8
    $region5: #{tpu_custom_call.1} parent=1 // loop_body
      %s27 = ssub.s32 %s22, 1
      %s28 = ssub.s32 %s22, 2
      %s29 = sadd.s32 %s22, 1
      %s30 = ssub.s32 %s22, %s29
      %p31 = scmp.eq.s32.totalorder %s30, 0
      %s33 = sadd.s32 %s32, 1
      %s34 = scalar_select %p31, %s32, %s33
      %p37 = pneg %p31
      %p38 = scmp.eq.s32.totalorder %s22, 1
      %p39 = por %p37, %p38
      %p40 = scmp.ne.s32.totalorder %s32, %s35
      %p41 = scmp.eq.s32.totalorder %s22, 0
      %p42 = por %p40, %p41
      %p43 = scmp.ne.s32.totalorder %s32, %s35
      %p44 = scmp.eq.s32.totalorder %s27, 1
      %p45 = por %p43, %p44
      %p46 = scmp.ne.s32.totalorder %s35, %s36
      %p47 = scmp.eq.s32.totalorder %s27, 0
      %p48 = por %p46, %p47
      %p49 = scmp.ne.s32.totalorder %s35, %s36
      %p50 = scmp.eq.s32.totalorder %s28, 1
      %p51 = por %p49, %p50
      %p53 = scmp.ne.s32.totalorder %s36, %s52
      %p54 = scmp.eq.s32.totalorder %s28, 0
      %p55 = por %p53, %p54
      %s57 = sadd.s32 %s56, 1
      %p60 = scmp.eq.s32.totalorder %s22, 1
      %p61 = scmp.ne.s32.totalorder %s56, %s58
      %p62 = scmp.eq.s32.totalorder %s22, 0
      %p63 = por %p61, %p62
      %p64 = scmp.ne.s32.totalorder %s56, %s58
      %p65 = scmp.eq.s32.totalorder %s27, 1
      %p66 = por %p64, %p65
      %p67 = scmp.ne.s32.totalorder %s58, %s59
      %p68 = scmp.eq.s32.totalorder %s27, 0
      %p69 = por %p67, %p68
      %p70 = scmp.ne.s32.totalorder %s58, %s59
      %p71 = scmp.eq.s32.totalorder %s28, 1
      %p72 = por %p70, %p71
      %p74 = scmp.ne.s32.totalorder %s59, %s73
      %p75 = scmp.eq.s32.totalorder %s28, 0
      %p76 = por %p74, %p75
      %s78 = sadd.s32 %s77, 1
      %p81 = scmp.eq.s32.totalorder %s22, 1
      %p82 = scmp.ne.s32.totalorder %s77, %s79
      %p83 = scmp.eq.s32.totalorder %s22, 0
      %p84 = por %p82, %p83
      %p85 = scmp.ne.s32.totalorder %s77, %s79
      %p86 = scmp.eq.s32.totalorder %s27, 1
      %p87 = por %p85, %p86
      %p88 = scmp.ne.s32.totalorder %s79, %s80
      %p89 = scmp.eq.s32.totalorder %s27, 0
      %p90 = por %p88, %p89
      %p91 = scmp.ne.s32.totalorder %s79, %s80
      %p92 = scmp.eq.s32.totalorder %s28, 1
      %p93 = por %p91, %p92
      %p95 = scmp.ne.s32.totalorder %s80, %s94
      %p96 = scmp.eq.s32.totalorder %s28, 0
      %p97 = por %p95, %p96
      %s99 = sadd.s32 %s98, 1
      %p102 = scmp.eq.s32.totalorder %s22, 1
      %p103 = scmp.ne.s32.totalorder %s98, %s100
      %p104 = scmp.eq.s32.totalorder %s22, 0
      %p105 = por %p103, %p104
      %p106 = scmp.ne.s32.totalorder %s98, %s100
      %p107 = scmp.eq.s32.totalorder %s27, 1
      %p108 = por %p106, %p107
      %p109 = scmp.ne.s32.totalorder %s100, %s101
      %p110 = scmp.eq.s32.totalorder %s27, 0
      %p111 = por %p109, %p110
      %p112 = scmp.ne.s32.totalorder %s100, %s101
      %p113 = scmp.eq.s32.totalorder %s28, 1
      %p114 = por %p112, %p113
      %p116 = scmp.ne.s32.totalorder %s101, %s115
      %p117 = scmp.eq.s32.totalorder %s28, 0
      %p118 = por %p116, %p117
      %s120 = sadd.s32 %s119, 1
      %p123 = scmp.eq.s32.totalorder %s22, 1
      %p124 = scmp.ne.s32.totalorder %s119, %s121
      %p125 = scmp.eq.s32.totalorder %s22, 0
      %p126 = por %p124, %p125
      %p127 = scmp.ne.s32.totalorder %s119, %s121
      %p128 = scmp.eq.s32.totalorder %s27, 1
      %p129 = por %p127, %p128
      %p130 = scmp.ne.s32.totalorder %s121, %s122
      %p131 = scmp.eq.s32.totalorder %s27, 0
      %p132 = por %p130, %p131
      %p133 = scmp.ne.s32.totalorder %s121, %s122
      %p134 = scmp.eq.s32.totalorder %s28, 1
      %p135 = por %p133, %p134
      %p137 = scmp.ne.s32.totalorder %s122, %s136
      %p138 = scmp.eq.s32.totalorder %s28, 0
      %p139 = por %p137, %p138
      %s140 = ssub.s32 %s22, %s29
      %p141 = scmp.eq.s32.totalorder %s140, 0
      %s143 = sadd.s32 %s142, 1
      %s144 = scalar_select %p141, %s142, %s143
      %p147 = pneg %p141
      %p148 = scmp.eq.s32.totalorder %s22, 1
      %p149 = por %p147, %p148
      %p150 = scmp.ne.s32.totalorder %s142, %s145
      %p151 = scmp.eq.s32.totalorder %s22, 0
      %p152 = por %p150, %p151
      %p153 = scmp.ne.s32.totalorder %s142, %s145
      %p154 = scmp.eq.s32.totalorder %s27, 1
      %p155 = por %p153, %p154
      %p156 = scmp.ne.s32.totalorder %s145, %s146
      %p157 = scmp.eq.s32.totalorder %s27, 0
      %p158 = por %p156, %p157
      %p159 = scmp.ne.s32.totalorder %s145, %s146
      %p160 = scmp.eq.s32.totalorder %s28, 1
      %p161 = por %p159, %p160
      %p163 = scmp.ne.s32.totalorder %s146, %s162
      %p164 = scmp.eq.s32.totalorder %s28, 0
      %p165 = por %p163, %p164
      %s166 = ssub.s32 %s22, %s29
      %p167 = scmp.eq.s32.totalorder %s166, 0
      %s169 = sadd.s32 %s168, 1
      %s170 = scalar_select %p167, %s168, %s169
      %p173 = pneg %p167
      %p174 = scmp.eq.s32.totalorder %s22, 1
      %p175 = por %p173, %p174
      %p176 = scmp.ne.s32.totalorder %s168, %s171
      %p177 = scmp.eq.s32.totalorder %s22, 0
      %p178 = por %p176, %p177
      %p179 = scmp.ne.s32.totalorder %s168, %s171
      %p180 = scmp.eq.s32.totalorder %s27, 1
      %p181 = por %p179, %p180
      %p182 = scmp.ne.s32.totalorder %s171, %s172
      %p183 = scmp.eq.s32.totalorder %s27, 0
      %p184 = por %p182, %p183
      %p185 = scmp.ne.s32.totalorder %s171, %s172
      %p186 = scmp.eq.s32.totalorder %s28, 1
      %p187 = por %p185, %p186
      %p189 = scmp.ne.s32.totalorder %s172, %s188
      %p190 = scmp.eq.s32.totalorder %s28, 0
      %p191 = por %p189, %p190
      %p192 = scmp.le.s32.totalorder 1, %s22
      %p193 = scmp.lt.s32.totalorder %s22, 3
      %p194 = pnand %p192, %p193
      %p195 = pneg %p194
      // Predicated region
      $region9: #{tpu_custom_call.1} parent=5 // pred_check
        _
      $region10: #{tpu_custom_call.1} parent=5 // pred_check_branch
        %197 = sbr.rel (%p194) target = $region12
      $region11: #{tpu_custom_call.1} parent=5 // pred_region
        %s198 = ssub.s32 %s22, 1
        // Predicated region
        $region13: #{tpu_custom_call.1} parent=11 // pred_check
          %p199 = pneg %p69
        $region14: #{tpu_custom_call.1} parent=11 // pred_check_branch
          %201 = sbr.rel (%p199) target = $region16
        $region15: #{tpu_custom_call.1} parent=11 // pred_region
          _
        $region16: #{tpu_custom_call.1} parent=11 // pred_fallthru
          _
        // Predicated region
        $region17: #{tpu_custom_call.1} parent=11 // pred_check
          %p202 = pneg %p90
        $region18: #{tpu_custom_call.1} parent=11 // pred_check_branch
          %204 = sbr.rel (%p202) target = $region20
        $region19: #{tpu_custom_call.1} parent=11 // pred_region
          _
        $region20: #{tpu_custom_call.1} parent=11 // pred_fallthru
          _
        // Predicated region
        $region21: #{tpu_custom_call.1} parent=11 // pred_check
          %p205 = pneg %p111
        $region22: #{tpu_custom_call.1} parent=11 // pred_check_branch
          %207 = sbr.rel (%p205) target = $region24
        $region23: #{tpu_custom_call.1} parent=11 // pred_region
          _
        $region24: #{tpu_custom_call.1} parent=11 // pred_fallthru
          _
        // Predicated region
        $region25: #{tpu_custom_call.1} parent=11 // pred_check
          %p208 = pneg %p132
        $region26: #{tpu_custom_call.1} parent=11 // pred_check_branch
          %210 = sbr.rel (%p208) target = $region28
        $region27: #{tpu_custom_call.1} parent=11 // pred_region
          _
        $region28: #{tpu_custom_call.1} parent=11 // pred_fallthru
          _
      $region12: #{tpu_custom_call.1} parent=5 // pred_fallthru
        _
      %p211 = scmp.lt.s32.totalorder %s22, 2
      // Predicated region
      $region29: #{tpu_custom_call.1} parent=5 // pred_check
        %p212 = pneg %p211
      $region30: #{tpu_custom_call.1} parent=5 // pred_check_branch
        %214 = sbr.rel (%p212) target = $region32
      $region31: #{tpu_custom_call.1} parent=5 // pred_region
        // Predicated region
        $region33: #{tpu_custom_call.1} parent=31 // pred_check
          %p215 = pneg %p42
        $region34: #{tpu_custom_call.1} parent=31 // pred_check_branch
          %217 = sbr.rel (%p215) target = $region36
        $region35: #{tpu_custom_call.1} parent=31 // pred_region
          %s218 = sand.u32 %s32, 1
          %s219 = scalar_lea.sflag [#allocation3], %s218
          %s220 = sand.u32 %s32, 1
          %s221 = smul.addr %s220, 64
          %s222 = scalar_lea.vmem [#allocation2], %s221
          %s223 = smul.u32 4, %s22
          %s225 = ssub.s32 1024, 1024
          %226 = vsyncadd %s219, %s225
          %s227 = smul.addr %s223, 2
          %s228 = smul.addr %s227, 128
          %s229 = scalar_lea.hbm %s0, %s228
          %s230 = sshll.u32 %s222, 4
          %s231 = int_to_ptr.vmem [resolvable:$true] %s230
          %236 = dma.hbm_to_vmem [thread:$0]  %s229, 1024, %s231, %s219, 128, 128, 8
        $region36: #{tpu_custom_call.1} parent=31 // pred_fallthru
          _
      $region32: #{tpu_custom_call.1} parent=5 // pred_fallthru
        _
      %p237 = scmp.le.s32.totalorder 1, %s22
      %p238 = scmp.lt.s32.totalorder %s22, 3
      %p239 = pnand %p237, %p238
      %p240 = pneg %p239
      // Predicated region
      $region37: #{tpu_custom_call.1} parent=5 // pred_check
        _
      $region38: #{tpu_custom_call.1} parent=5 // pred_check_branch
        %242 = sbr.rel (%p239) target = $region40
      $region39: #{tpu_custom_call.1} parent=5 // pred_region
        %s243 = ssub.s32 %s22, 1
        %s244 = sand.u32 %s35, 1
        %s245 = scalar_lea.sflag [#allocation3], %s244
        %s246 = sand.u32 %s35, 1
        %s247 = smul.addr %s246, 64
        %s248 = scalar_lea.vmem [#allocation2], %s247
        // Predicated region
        $region41: #{tpu_custom_call.1} parent=39 // pred_check
          %p249 = pneg %p48
        $region42: #{tpu_custom_call.1} parent=39 // pred_check_branch
          %251 = sbr.rel (%p249) target = $region44
        $region43: #{tpu_custom_call.1} parent=39 // pred_region
          %252 = dma.done %s245, 1024
        $region44: #{tpu_custom_call.1} parent=39 // pred_fallthru
          _
        %s253 = sand.u32 %s35, 1
        %s254 = scalar_lea.sflag [#allocation3], %s253
        %s255 = sand.u32 %s35, 1
        %s256 = smul.addr %s255, 64
        %s257 = scalar_lea.vmem [#allocation2], %s256
        %p258 = pneg %p48
        %p259 = pneg %p45
        %p260 = pneg %p69
        %p261 = pneg %p66
        %p262 = pneg %p90
        %p263 = pneg %p87
        %p264 = pneg %p111
        %p265 = pneg %p108
        %p266 = pneg %p132
        %p267 = pneg %p129
        %p268 = pneg %p158
        %p269 = pneg %p155
        %s270 = sand.u32 %s145, 1
        %s271 = scalar_lea.sflag [#allocation4], %s270
        %s272 = sand.u32 %s145, 1
        %s273 = smul.addr %s272, 32
        %s274 = scalar_lea.vmem [#allocation5], %s273
        %p275 = pneg %p184
        %p276 = pneg %p181
        %s277 = sand.u32 %s171, 1
        %s278 = scalar_lea.sflag [#allocation7], %s277
        %s279 = sand.u32 %s171, 1
        %s280 = smul.addr %s279, 128
        %s281 = scalar_lea.vmem [#allocation6], %s280
        %s282 = smul.u32 4, %s27
        %s283 = smul.u32 4, %s27
        %s284 = smul.u32 4, %s27
        %v285 = vld [vmem:[%s248] sm:$0xff]
        %v286 = vld [vmem:[%s248 + $0x8] sm:$0xff]
        %v287 = vld [vmem:[%s248 + $0x10] sm:$0xff]
        %v288 = vld [vmem:[%s248 + $0x18] sm:$0xff]
        %v289 = vld [vmem:[%s248 + $0x20] sm:$0xff]
        %v290 = vld [vmem:[%s248 + $0x28] sm:$0xff]
        %v291 = vld [vmem:[%s248 + $0x30] sm:$0xff]
        %v292 = vld [vmem:[%s248 + $0x38] sm:$0xff]
        %v293 = vld [vmem:[%s1] sm:$0xff]
        %v294 = vld [vmem:[%s2] sm:$0xff]
        %v295 = vld [vmem:[%s2 + $0x8] sm:$0xff]
        %vm296 = vcmask 130048
        %v298 = vsel %vm296, %v285, 0
        %v301 = vsel %vm296, %v286, 0
        %v304 = vsel %vm296, %v287, 0
        %v307 = vsel %vm296, %v288, 0
        %v310 = vsel %vm296, %v289, 0
        %v313 = vsel %vm296, %v290, 0
        %v316 = vsel %vm296, %v291, 0
        %v319 = vsel %vm296, %v292, 0
        %321 = vmatprep.subr.mxu0 0.0
        %322 = vmatpush1.msra.mxu0 %v294
        %323 = vmatprep.subr.mxu0 0.0
        %324 = vmatpush1.msra.mxu0 %v295
        %325 = vmatprep.subr.mxu0 0.0
        %326 = vmatpush1.msra.mxu0 0.0
        %327 = vmatprep.subr.mxu0 0.0
        %328 = vmatpush1.msra.mxu0 0.0
        %329 = vmatprep.subr.mxu0 0.0
        %330 = vmatpush1.msra.mxu0 0.0
        %331 = vmatprep.subr.mxu0 0.0
        %332 = vmatpush1.msra.mxu0 0.0
        %333 = vmatprep.subr.mxu0 0.0
        %334 = vmatpush1.msra.mxu0 0.0
        %335 = vmatprep.subr.mxu0 0.0
        %336 = vmatpush1.msra.mxu0 0.0
        %337 = vmatprep.subr.mxu0 0.0
        %338 = vmatpush1.msra.mxu0 0.0
        %339 = vmatprep.subr.mxu0 0.0
        %340 = vmatpush1.msra.mxu0 0.0
        %341 = vmatprep.subr.mxu0 0.0
        %342 = vmatpush1.msra.mxu0 0.0
        %343 = vmatprep.subr.mxu0 0.0
        %344 = vmatpush1.msra.mxu0 0.0
        %345 = vmatprep.subr.mxu0 0.0
        %346 = vmatpush1.msra.mxu0 0.0
        %347 = vmatprep.subr.mxu0 0.0
        %348 = vmatpush1.msra.mxu0 0.0
        %349 = vmatprep.subr.mxu0 0.0
        %350 = vmatpush1.msra.mxu0 0.0
        %351 = vmatprep.subr.mxu0 0.0
        %352 = vmatpush1.msra.mxu0 0.0
        %353 = vmatprep.subr.mxu0 0.0
        %354 = vmatpush1.msra.mxu0 0.0
        %355 = vmatprep.subr.mxu0 0.0
        %356 = vmatpush1.msra.mxu0 0.0
        %357 = vmatprep.subr.mxu0 0.0
        %358 = vmatpush1.msra.mxu0 0.0
        %359 = vmatprep.subr.mxu0 0.0
        %360 = vmatpush1.msra.mxu0 0.0
        %361 = vmatprep.subr.mxu0 0.0
        %362 = vmatpush1.msra.mxu0 0.0
        %363 = vmatprep.subr.mxu0 0.0
        %364 = vmatpush1.msra.mxu0 0.0
        %365 = vmatprep.subr.mxu0 0.0
        %366 = vmatpush1.msra.mxu0 0.0
        %367 = vmatprep.subr.mxu0 0.0
        %368 = vmatpush1.msra.mxu0 0.0
        %369 = vmatprep.subr.mxu0 0.0
        %370 = vmatpush1.msra.mxu0 0.0
        %371 = vmatprep.subr.mxu0 0.0
        %372 = vmatpush1.msra.mxu0 0.0
        %373 = vmatprep.subr.mxu0 0.0
        %374 = vmatpush1.msra.mxu0 0.0
        %375 = vmatprep.subr.mxu0 0.0
        %376 = vmatpush1.msra.mxu0 0.0
        %377 = vmatprep.subr.mxu0 0.0
        %378 = vmatpush1.msra.mxu0 0.0
        %379 = vmatprep.subr.mxu0 0.0
        %380 = vmatpush1.msra.mxu0 0.0
        %381 = vmatprep.subr.mxu0 0.0
        %382 = vmatpush1.msra.mxu0 0.0
        %383 = vmatprep.subr.mxu0 0.0
        %384 = vmatpush1.msra.mxu0 0.0
        %385 = vmatprep.mubr.f32.mxu0 0.0
        %386 = vmatmul.mubr.f32.gmra.mrb[0].mxu0 %v298
        %v387 = vpop.f32.mrb[0].mxu0
        %v388 = vadd.f32 0.0, %v387
        %v389 = vpop.f32.mrb[0].mxu0
        %390 = vmatprep.mubr.f32.mxu0 0.0
        %391 = vmatmul.mubr.f32.gmra.mrb[0].mxu0 %v301
        %v392 = vpop.f32.mrb[0].mxu0
        %v393 = vadd.f32 0.0, %v392
        %v394 = vpop.f32.mrb[0].mxu0
        %395 = vmatprep.mubr.f32.mxu0 0.0
        %396 = vmatmul.mubr.f32.gmra.mrb[0].mxu0 %v304
        %v397 = vpop.f32.mrb[0].mxu0
        %v398 = vadd.f32 0.0, %v397
        %v399 = vpop.f32.mrb[0].mxu0
        %400 = vmatprep.mubr.f32.mxu0 0.0
        %401 = vmatmul.mubr.f32.gmra.mrb[0].mxu0 %v307
        %v402 = vpop.f32.mrb[0].mxu0
        %v403 = vadd.f32 0.0, %v402
        %v404 = vpop.f32.mrb[0].mxu0
        %405 = vmatprep.mubr.f32.mxu0 0.0
        %406 = vmatmul.mubr.f32.gmra.mrb[0].mxu0 %v310
        %v407 = vpop.f32.mrb[0].mxu0
        %v408 = vadd.f32 0.0, %v407
        %v409 = vpop.f32.mrb[0].mxu0
        %410 = vmatprep.mubr.f32.mxu0 0.0
        %411 = vmatmul.mubr.f32.gmra.mrb[0].mxu0 %v313
        %v412 = vpop.f32.mrb[0].mxu0
        %v413 = vadd.f32 0.0, %v412
        %v414 = vpop.f32.mrb[0].mxu0
        %415 = vmatprep.mubr.f32.mxu0 0.0
        %416 = vmatmul.mubr.f32.gmra.mrb[0].mxu0 %v316
        %v417 = vpop.f32.mrb[0].mxu0
        %v418 = vadd.f32 0.0, %v417
        %v419 = vpop.f32.mrb[0].mxu0
        %420 = vmatprep.mubr.f32.mxu0 0.0
        %421 = vmatmul.mubr.f32.gmra.mrb[0].mxu0 %v319
        %v422 = vpop.f32.mrb[0].mxu0
        %v423 = vadd.f32 0.0, %v422
        %v424 = vpop.f32.mrb[0].mxu0
        %425 = vdwg.mxu0
        %v427 = vsel %vm296, %v293, 0
        %429 = vmatprep.subr.mxu0 0.0
        %430 = vmatpush1.msra.mxu0 %v388
        %431 = vmatprep.subr.mxu0 0.0
        %432 = vmatpush1.msra.mxu0 %v393
        %433 = vmatprep.subr.mxu0 0.0
        %434 = vmatpush1.msra.mxu0 0.0
        %435 = vmatprep.subr.mxu0 0.0
        %436 = vmatpush1.msra.mxu0 0.0
        %437 = vmatprep.subr.mxu0 0.0
        %438 = vmatpush1.msra.mxu0 0.0
        %439 = vmatprep.subr.mxu0 0.0
        %440 = vmatpush1.msra.mxu0 0.0
        %441 = vmatprep.subr.mxu0 0.0
        %442 = vmatpush1.msra.mxu0 0.0
        %443 = vmatprep.subr.mxu0 0.0
        %444 = vmatpush1.msra.mxu0 0.0
        %445 = vmatprep.subr.mxu0 0.0
        %446 = vmatpush1.msra.mxu0 0.0
        %447 = vmatprep.subr.mxu0 0.0
        %448 = vmatpush1.msra.mxu0 0.0
        %449 = vmatprep.subr.mxu0 0.0
        %450 = vmatpush1.msra.mxu0 0.0
        %451 = vmatprep.subr.mxu0 0.0
        %452 = vmatpush1.msra.mxu0 0.0
        %453 = vmatprep.subr.mxu0 0.0
        %454 = vmatpush1.msra.mxu0 0.0
        %455 = vmatprep.subr.mxu0 0.0
        %456 = vmatpush1.msra.mxu0 0.0
        %457 = vmatprep.subr.mxu0 0.0
        %458 = vmatpush1.msra.mxu0 0.0
        %459 = vmatprep.subr.mxu0 0.0
        %460 = vmatpush1.msra.mxu0 0.0
        %461 = vmatprep.subr.mxu0 0.0
        %462 = vmatpush1.msra.mxu0 0.0
        %463 = vmatprep.subr.mxu0 0.0
        %464 = vmatpush1.msra.mxu0 0.0
        %465 = vmatprep.subr.mxu0 0.0
        %466 = vmatpush1.msra.mxu0 0.0
        %467 = vmatprep.subr.mxu0 0.0
        %468 = vmatpush1.msra.mxu0 0.0
        %469 = vmatprep.subr.mxu0 0.0
        %470 = vmatpush1.msra.mxu0 0.0
        %471 = vmatprep.subr.mxu0 0.0
        %472 = vmatpush1.msra.mxu0 0.0
        %473 = vmatprep.subr.mxu0 0.0
        %474 = vmatpush1.msra.mxu0 0.0
        %475 = vmatprep.subr.mxu0 0.0
        %476 = vmatpush1.msra.mxu0 0.0
        %477 = vmatprep.subr.mxu0 0.0
        %478 = vmatpush1.msra.mxu0 0.0
        %479 = vmatprep.subr.mxu0 0.0
        %480 = vmatpush1.msra.mxu0 0.0
        %481 = vmatprep.subr.mxu0 0.0
        %482 = vmatpush1.msra.mxu0 0.0
        %483 = vmatprep.subr.mxu0 0.0
        %484 = vmatpush1.msra.mxu0 0.0
        %485 = vmatprep.subr.mxu0 0.0
        %486 = vmatpush1.msra.mxu0 0.0
        %487 = vmatprep.subr.mxu0 0.0
        %488 = vmatpush1.msra.mxu0 0.0
        %489 = vmatprep.subr.mxu0 0.0
        %490 = vmatpush1.msra.mxu0 0.0
        %491 = vmatprep.subr.mxu0 0.0
        %492 = vmatpush1.msra.mxu0 0.0
        %493 = vmatprep.mubr.f32.mxu0 0.0
        %494 = vmatmul.mubr.f32.gmra.mrb[0].mxu0 %v427
        %v495 = vpop.f32.mrb[0].mxu0
        %v496 = vadd.f32 0.0, %v495
        %v497 = vpop.f32.mrb[0].mxu0
        %498 = vdwg.mxu0
        %499 = vmatprep.subr.mxu0 0.0
        %500 = vmatpush1.msra.mxu0 %v398
        %501 = vmatprep.subr.mxu0 0.0
        %502 = vmatpush1.msra.mxu0 %v403
        %503 = vmatprep.subr.mxu0 0.0
        %504 = vmatpush1.msra.mxu0 0.0
        %505 = vmatprep.subr.mxu0 0.0
        %506 = vmatpush1.msra.mxu0 0.0
        %507 = vmatprep.subr.mxu0 0.0
        %508 = vmatpush1.msra.mxu0 0.0
        %509 = vmatprep.subr.mxu0 0.0
        %510 = vmatpush1.msra.mxu0 0.0
        %511 = vmatprep.subr.mxu0 0.0
        %512 = vmatpush1.msra.mxu0 0.0
        %513 = vmatprep.subr.mxu0 0.0
        %514 = vmatpush1.msra.mxu0 0.0
        %515 = vmatprep.subr.mxu0 0.0
        %516 = vmatpush1.msra.mxu0 0.0
        %517 = vmatprep.subr.mxu0 0.0
        %518 = vmatpush1.msra.mxu0 0.0
        %519 = vmatprep.subr.mxu0 0.0
        %520 = vmatpush1.msra.mxu0 0.0
        %521 = vmatprep.subr.mxu0 0.0
        %522 = vmatpush1.msra.mxu0 0.0
        %523 = vmatprep.subr.mxu0 0.0
        %524 = vmatpush1.msra.mxu0 0.0
        %525 = vmatprep.subr.mxu0 0.0
        %526 = vmatpush1.msra.mxu0 0.0
        %527 = vmatprep.subr.mxu0 0.0
        %528 = vmatpush1.msra.mxu0 0.0
        %529 = vmatprep.subr.mxu0 0.0
        %530 = vmatpush1.msra.mxu0 0.0
        %531 = vmatprep.subr.mxu0 0.0
        %532 = vmatpush1.msra.mxu0 0.0
        %533 = vmatprep.subr.mxu0 0.0
        %534 = vmatpush1.msra.mxu0 0.0
        %535 = vmatprep.subr.mxu0 0.0
        %536 = vmatpush1.msra.mxu0 0.0
        %537 = vmatprep.subr.mxu0 0.0
        %538 = vmatpush1.msra.mxu0 0.0
        %539 = vmatprep.subr.mxu0 0.0
        %540 = vmatpush1.msra.mxu0 0.0
        %541 = vmatprep.subr.mxu0 0.0
        %542 = vmatpush1.msra.mxu0 0.0
        %543 = vmatprep.subr.mxu0 0.0
        %544 = vmatpush1.msra.mxu0 0.0
        %545 = vmatprep.subr.mxu0 0.0
        %546 = vmatpush1.msra.mxu0 0.0
        %547 = vmatprep.subr.mxu0 0.0
        %548 = vmatpush1.msra.mxu0 0.0
        %549 = vmatprep.subr.mxu0 0.0
        %550 = vmatpush1.msra.mxu0 0.0
        %551 = vmatprep.subr.mxu0 0.0
        %552 = vmatpush1.msra.mxu0 0.0
        %553 = vmatprep.subr.mxu0 0.0
        %554 = vmatpush1.msra.mxu0 0.0
        %555 = vmatprep.subr.mxu0 0.0
        %556 = vmatpush1.msra.mxu0 0.0
        %557 = vmatprep.subr.mxu0 0.0
        %558 = vmatpush1.msra.mxu0 0.0
        %559 = vmatprep.subr.mxu0 0.0
        %560 = vmatpush1.msra.mxu0 0.0
        %561 = vmatprep.subr.mxu0 0.0
        %562 = vmatpush1.msra.mxu0 0.0
        %563 = vmatprep.mubr.f32.mxu0 0.0
        %564 = vmatmul.mubr.f32.gmra.mrb[0].mxu0 %v427
        %v565 = vpop.f32.mrb[0].mxu0
        %v566 = vadd.f32 0.0, %v565
        %v567 = vpop.f32.mrb[0].mxu0
        %568 = vdwg.mxu0
        %569 = vmatprep.subr.mxu0 0.0
        %570 = vmatpush1.msra.mxu0 %v408
        %571 = vmatprep.subr.mxu0 0.0
        %572 = vmatpush1.msra.mxu0 %v413
        %573 = vmatprep.subr.mxu0 0.0
        %574 = vmatpush1.msra.mxu0 0.0
        %575 = vmatprep.subr.mxu0 0.0
        %576 = vmatpush1.msra.mxu0 0.0
        %577 = vmatprep.subr.mxu0 0.0
        %578 = vmatpush1.msra.mxu0 0.0
        %579 = vmatprep.subr.mxu0 0.0
        %580 = vmatpush1.msra.mxu0 0.0
        %581 = vmatprep.subr.mxu0 0.0
        %582 = vmatpush1.msra.mxu0 0.0
        %583 = vmatprep.subr.mxu0 0.0
        %584 = vmatpush1.msra.mxu0 0.0
        %585 = vmatprep.subr.mxu0 0.0
        %586 = vmatpush1.msra.mxu0 0.0
        %587 = vmatprep.subr.mxu0 0.0
        %588 = vmatpush1.msra.mxu0 0.0
        %589 = vmatprep.subr.mxu0 0.0
        %590 = vmatpush1.msra.mxu0 0.0
        %591 = vmatprep.subr.mxu0 0.0
        %592 = vmatpush1.msra.mxu0 0.0
        %593 = vmatprep.subr.mxu0 0.0
        %594 = vmatpush1.msra.mxu0 0.0
        %595 = vmatprep.subr.mxu0 0.0
        %596 = vmatpush1.msra.mxu0 0.0
        %597 = vmatprep.subr.mxu0 0.0
        %598 = vmatpush1.msra.mxu0 0.0
        %599 = vmatprep.subr.mxu0 0.0
        %600 = vmatpush1.msra.mxu0 0.0
        %601 = vmatprep.subr.mxu0 0.0
        %602 = vmatpush1.msra.mxu0 0.0
        %603 = vmatprep.subr.mxu0 0.0
        %604 = vmatpush1.msra.mxu0 0.0
        %605 = vmatprep.subr.mxu0 0.0
        %606 = vmatpush1.msra.mxu0 0.0
        %607 = vmatprep.subr.mxu0 0.0
        %608 = vmatpush1.msra.mxu0 0.0
        %609 = vmatprep.subr.mxu0 0.0
        %610 = vmatpush1.msra.mxu0 0.0
        %611 = vmatprep.subr.mxu0 0.0
        %612 = vmatpush1.msra.mxu0 0.0
        %613 = vmatprep.subr.mxu0 0.0
        %614 = vmatpush1.msra.mxu0 0.0
        %615 = vmatprep.subr.mxu0 0.0
        %616 = vmatpush1.msra.mxu0 0.0
        %617 = vmatprep.subr.mxu0 0.0
        %618 = vmatpush1.msra.mxu0 0.0
        %619 = vmatprep.subr.mxu0 0.0
        %620 = vmatpush1.msra.mxu0 0.0
        %621 = vmatprep.subr.mxu0 0.0
        %622 = vmatpush1.msra.mxu0 0.0
        %623 = vmatprep.subr.mxu0 0.0
        %624 = vmatpush1.msra.mxu0 0.0
        %625 = vmatprep.subr.mxu0 0.0
        %626 = vmatpush1.msra.mxu0 0.0
        %627 = vmatprep.subr.mxu0 0.0
        %628 = vmatpush1.msra.mxu0 0.0
        %629 = vmatprep.subr.mxu0 0.0
        %630 = vmatpush1.msra.mxu0 0.0
        %631 = vmatprep.subr.mxu0 0.0
        %632 = vmatpush1.msra.mxu0 0.0
        %633 = vmatprep.mubr.f32.mxu0 0.0
        %634 = vmatmul.mubr.f32.gmra.mrb[0].mxu0 %v427
        %v635 = vpop.f32.mrb[0].mxu0
        %v636 = vadd.f32 0.0, %v635
        %v637 = vpop.f32.mrb[0].mxu0
        %638 = vdwg.mxu0
        %639 = vmatprep.subr.mxu0 0.0
        %640 = vmatpush1.msra.mxu0 %v418
        %641 = vmatprep.subr.mxu0 0.0
        %642 = vmatpush1.msra.mxu0 %v423
        %643 = vmatprep.subr.mxu0 0.0
        %644 = vmatpush1.msra.mxu0 0.0
        %645 = vmatprep.subr.mxu0 0.0
        %646 = vmatpush1.msra.mxu0 0.0
        %647 = vmatprep.subr.mxu0 0.0
        %648 = vmatpush1.msra.mxu0 0.0
        %649 = vmatprep.subr.mxu0 0.0
        %650 = vmatpush1.msra.mxu0 0.0
        %651 = vmatprep.subr.mxu0 0.0
        %652 = vmatpush1.msra.mxu0 0.0
        %653 = vmatprep.subr.mxu0 0.0
        %654 = vmatpush1.msra.mxu0 0.0
        %655 = vmatprep.subr.mxu0 0.0
        %656 = vmatpush1.msra.mxu0 0.0
        %657 = vmatprep.subr.mxu0 0.0
        %658 = vmatpush1.msra.mxu0 0.0
        %659 = vmatprep.subr.mxu0 0.0
        %660 = vmatpush1.msra.mxu0 0.0
        %661 = vmatprep.subr.mxu0 0.0
        %662 = vmatpush1.msra.mxu0 0.0
        %663 = vmatprep.subr.mxu0 0.0
        %664 = vmatpush1.msra.mxu0 0.0
        %665 = vmatprep.subr.mxu0 0.0
        %666 = vmatpush1.msra.mxu0 0.0
        %667 = vmatprep.subr.mxu0 0.0
        %668 = vmatpush1.msra.mxu0 0.0
        %669 = vmatprep.subr.mxu0 0.0
        %670 = vmatpush1.msra.mxu0 0.0
        %671 = vmatprep.subr.mxu0 0.0
        %672 = vmatpush1.msra.mxu0 0.0
        %673 = vmatprep.subr.mxu0 0.0
        %674 = vmatpush1.msra.mxu0 0.0
        %675 = vmatprep.subr.mxu0 0.0
        %676 = vmatpush1.msra.mxu0 0.0
        %677 = vmatprep.subr.mxu0 0.0
        %678 = vmatpush1.msra.mxu0 0.0
        %679 = vmatprep.subr.mxu0 0.0
        %680 = vmatpush1.msra.mxu0 0.0
        %681 = vmatprep.subr.mxu0 0.0
        %682 = vmatpush1.msra.mxu0 0.0
        %683 = vmatprep.subr.mxu0 0.0
        %684 = vmatpush1.msra.mxu0 0.0
        %685 = vmatprep.subr.mxu0 0.0
        %686 = vmatpush1.msra.mxu0 0.0
        %687 = vmatprep.subr.mxu0 0.0
        %688 = vmatpush1.msra.mxu0 0.0
        %689 = vmatprep.subr.mxu0 0.0
        %690 = vmatpush1.msra.mxu0 0.0
        %691 = vmatprep.subr.mxu0 0.0
        %692 = vmatpush1.msra.mxu0 0.0
        %693 = vmatprep.subr.mxu0 0.0
        %694 = vmatpush1.msra.mxu0 0.0
        %695 = vmatprep.subr.mxu0 0.0
        %696 = vmatpush1.msra.mxu0 0.0
        %697 = vmatprep.subr.mxu0 0.0
        %698 = vmatpush1.msra.mxu0 0.0
        %699 = vmatprep.subr.mxu0 0.0
        %700 = vmatpush1.msra.mxu0 0.0
        %701 = vmatprep.subr.mxu0 0.0
        %702 = vmatpush1.msra.mxu0 0.0
        %703 = vmatprep.mubr.f32.mxu0 0.0
        %704 = vmatmul.mubr.f32.gmra.mrb[0].mxu0 %v427
        %v705 = vpop.f32.mrb[0].mxu0
        %v706 = vadd.f32 0.0, %v705
        %v707 = vpop.f32.mrb[0].mxu0
        %708 = vdwg.mxu0
        %vm709 = vcmask 64512
        %710 = vst.msk [vmem:[%s274] sm:$0xff] %vm709, %v496
        %711 = vst.msk [vmem:[%s274 + $0x8] sm:$0xff] %vm709, %v566
        %712 = vst.msk [vmem:[%s274 + $0x10] sm:$0xff] %vm709, %v636
        %713 = vst.msk [vmem:[%s274 + $0x18] sm:$0xff] %vm709, %v706
        %v714 = vld [vmem:[%s3] sm:$0xff]
        %v715 = vld [vmem:[%s3 + $0x8] sm:$0xff]
        %v716 = vld [vmem:[%s3 + $0x10] sm:$0xff]
        %v717 = vld [vmem:[%s3 + $0x18] sm:$0xff]
        %v718 = vld [vmem:[%s4] sm:$0xff]
        %v719 = vld [vmem:[%s4 + $0x8] sm:$0xff]
        %720 = vmatprep.subr.mxu0 0.0
        %721 = vmatpush1.msra.mxu0 %v718
        %722 = vmatprep.subr.mxu0 0.0
        %723 = vmatpush1.msra.mxu0 %v719
        %724 = vmatprep.subr.mxu0 0.0
        %725 = vmatpush1.msra.mxu0 0.0
        %726 = vmatprep.subr.mxu0 0.0
        %727 = vmatpush1.msra.mxu0 0.0
        %728 = vmatprep.subr.mxu0 0.0
        %729 = vmatpush1.msra.mxu0 0.0
        %730 = vmatprep.subr.mxu0 0.0
        %731 = vmatpush1.msra.mxu0 0.0
        %732 = vmatprep.subr.mxu0 0.0
        %733 = vmatpush1.msra.mxu0 0.0
        %734 = vmatprep.subr.mxu0 0.0
        %735 = vmatpush1.msra.mxu0 0.0
        %736 = vmatprep.subr.mxu0 0.0
        %737 = vmatpush1.msra.mxu0 0.0
        %738 = vmatprep.subr.mxu0 0.0
        %739 = vmatpush1.msra.mxu0 0.0
        %740 = vmatprep.subr.mxu0 0.0
        %741 = vmatpush1.msra.mxu0 0.0
        %742 = vmatprep.subr.mxu0 0.0
        %743 = vmatpush1.msra.mxu0 0.0
        %744 = vmatprep.subr.mxu0 0.0
        %745 = vmatpush1.msra.mxu0 0.0
        %746 = vmatprep.subr.mxu0 0.0
        %747 = vmatpush1.msra.mxu0 0.0
        %748 = vmatprep.subr.mxu0 0.0
        %749 = vmatpush1.msra.mxu0 0.0
        %750 = vmatprep.subr.mxu0 0.0
        %751 = vmatpush1.msra.mxu0 0.0
        %752 = vmatprep.subr.mxu0 0.0
        %753 = vmatpush1.msra.mxu0 0.0
        %754 = vmatprep.subr.mxu0 0.0
        %755 = vmatpush1.msra.mxu0 0.0
        %756 = vmatprep.subr.mxu0 0.0
        %757 = vmatpush1.msra.mxu0 0.0
        %758 = vmatprep.subr.mxu0 0.0
        %759 = vmatpush1.msra.mxu0 0.0
        %760 = vmatprep.subr.mxu0 0.0
        %761 = vmatpush1.msra.mxu0 0.0
        %762 = vmatprep.subr.mxu0 0.0
        %763 = vmatpush1.msra.mxu0 0.0
        %764 = vmatprep.subr.mxu0 0.0
        %765 = vmatpush1.msra.mxu0 0.0
        %766 = vmatprep.subr.mxu0 0.0
        %767 = vmatpush1.msra.mxu0 0.0
        %768 = vmatprep.subr.mxu0 0.0
        %769 = vmatpush1.msra.mxu0 0.0
        %770 = vmatprep.subr.mxu0 0.0
        %771 = vmatpush1.msra.mxu0 0.0
        %772 = vmatprep.subr.mxu0 0.0
        %773 = vmatpush1.msra.mxu0 0.0
        %774 = vmatprep.subr.mxu0 0.0
        %775 = vmatpush1.msra.mxu0 0.0
        %776 = vmatprep.subr.mxu0 0.0
        %777 = vmatpush1.msra.mxu0 0.0
        %778 = vmatprep.subr.mxu0 0.0
        %779 = vmatpush1.msra.mxu0 0.0
        %780 = vmatprep.subr.mxu0 0.0
        %781 = vmatpush1.msra.mxu0 0.0
        %782 = vmatprep.subr.mxu0 0.0
        %783 = vmatpush1.msra.mxu0 0.0
        %784 = vmatprep.mubr.f32.mxu0 0.0
        %785 = vmatmul.mubr.f32.gmra.mrb[0].mxu0 %v298
        %v786 = vpop.f32.mrb[0].mxu0
        %v787 = vadd.f32 0.0, %v786
        %v788 = vpop.f32.mrb[0].mxu0
        %789 = vmatprep.mubr.f32.mxu0 0.0
        %790 = vmatmul.mubr.f32.gmra.mrb[0].mxu0 %v301
        %v791 = vpop.f32.mrb[0].mxu0
        %v792 = vadd.f32 0.0, %v791
        %v793 = vpop.f32.mrb[0].mxu0
        %794 = vmatprep.mubr.f32.mxu0 0.0
        %795 = vmatmul.mubr.f32.gmra.mrb[0].mxu0 %v304
        %v796 = vpop.f32.mrb[0].mxu0
        %v797 = vadd.f32 0.0, %v796
        %v798 = vpop.f32.mrb[0].mxu0
        %799 = vmatprep.mubr.f32.mxu0 0.0
        %800 = vmatmul.mubr.f32.gmra.mrb[0].mxu0 %v307
        %v801 = vpop.f32.mrb[0].mxu0
        %v802 = vadd.f32 0.0, %v801
        %v803 = vpop.f32.mrb[0].mxu0
        %804 = vmatprep.mubr.f32.mxu0 0.0
        %805 = vmatmul.mubr.f32.gmra.mrb[0].mxu0 %v310
        %v806 = vpop.f32.mrb[0].mxu0
        %v807 = vadd.f32 0.0, %v806
        %v808 = vpop.f32.mrb[0].mxu0
        %809 = vmatprep.mubr.f32.mxu0 0.0
        %810 = vmatmul.mubr.f32.gmra.mrb[0].mxu0 %v313
        %v811 = vpop.f32.mrb[0].mxu0
        %v812 = vadd.f32 0.0, %v811
        %v813 = vpop.f32.mrb[0].mxu0
        %814 = vmatprep.mubr.f32.mxu0 0.0
        %815 = vmatmul.mubr.f32.gmra.mrb[0].mxu0 %v316
        %v816 = vpop.f32.mrb[0].mxu0
        %v817 = vadd.f32 0.0, %v816
        %v818 = vpop.f32.mrb[0].mxu0
        %819 = vmatprep.mubr.f32.mxu0 0.0
        %820 = vmatmul.mubr.f32.gmra.mrb[0].mxu0 %v319
        %v821 = vpop.f32.mrb[0].mxu0
        %v822 = vadd.f32 0.0, %v821
        %v823 = vpop.f32.mrb[0].mxu0
        %824 = vdwg.mxu0
        %v826 = vsel %vm296, %v714, 0
        %v829 = vsel %vm296, %v715, 0
        %v832 = vsel %vm296, %v716, 0
        %v835 = vsel %vm296, %v717, 0
        %837 = vmatprep.subr.mxu0 0.0
        %838 = vmatpush1.msra.mxu0 %v787
        %839 = vmatprep.subr.mxu0 0.0
        %840 = vmatpush1.msra.mxu0 %v792
        %841 = vmatprep.subr.mxu0 0.0
        %842 = vmatpush1.msra.mxu0 0.0
        %843 = vmatprep.subr.mxu0 0.0
        %844 = vmatpush1.msra.mxu0 0.0
        %845 = vmatprep.subr.mxu0 0.0
        %846 = vmatpush1.msra.mxu0 0.0
        %847 = vmatprep.subr.mxu0 0.0
        %848 = vmatpush1.msra.mxu0 0.0
        %849 = vmatprep.subr.mxu0 0.0
        %850 = vmatpush1.msra.mxu0 0.0
        %851 = vmatprep.subr.mxu0 0.0
        %852 = vmatpush1.msra.mxu0 0.0
        %853 = vmatprep.subr.mxu0 0.0
        %854 = vmatpush1.msra.mxu0 0.0
        %855 = vmatprep.subr.mxu0 0.0
        %856 = vmatpush1.msra.mxu0 0.0
        %857 = vmatprep.subr.mxu0 0.0
        %858 = vmatpush1.msra.mxu0 0.0
        %859 = vmatprep.subr.mxu0 0.0
        %860 = vmatpush1.msra.mxu0 0.0
        %861 = vmatprep.subr.mxu0 0.0
        %862 = vmatpush1.msra.mxu0 0.0
        %863 = vmatprep.subr.mxu0 0.0
        %864 = vmatpush1.msra.mxu0 0.0
        %865 = vmatprep.subr.mxu0 0.0
        %866 = vmatpush1.msra.mxu0 0.0
        %867 = vmatprep.subr.mxu0 0.0
        %868 = vmatpush1.msra.mxu0 0.0
        %869 = vmatprep.subr.mxu0 0.0
        %870 = vmatpush1.msra.mxu0 0.0
        %871 = vmatprep.subr.mxu0 0.0
        %872 = vmatpush1.msra.mxu0 0.0
        %873 = vmatprep.subr.mxu0 0.0
        %874 = vmatpush1.msra.mxu0 0.0
        %875 = vmatprep.subr.mxu0 0.0
        %876 = vmatpush1.msra.mxu0 0.0
        %877 = vmatprep.subr.mxu0 0.0
        %878 = vmatpush1.msra.mxu0 0.0
        %879 = vmatprep.subr.mxu0 0.0
        %880 = vmatpush1.msra.mxu0 0.0
        %881 = vmatprep.subr.mxu0 0.0
        %882 = vmatpush1.msra.mxu0 0.0
        %883 = vmatprep.subr.mxu0 0.0
        %884 = vmatpush1.msra.mxu0 0.0
        %885 = vmatprep.subr.mxu0 0.0
        %886 = vmatpush1.msra.mxu0 0.0
        %887 = vmatprep.subr.mxu0 0.0
        %888 = vmatpush1.msra.mxu0 0.0
        %889 = vmatprep.subr.mxu0 0.0
        %890 = vmatpush1.msra.mxu0 0.0
        %891 = vmatprep.subr.mxu0 0.0
        %892 = vmatpush1.msra.mxu0 0.0
        %893 = vmatprep.subr.mxu0 0.0
        %894 = vmatpush1.msra.mxu0 0.0
        %895 = vmatprep.subr.mxu0 0.0
        %896 = vmatpush1.msra.mxu0 0.0
        %897 = vmatprep.subr.mxu0 0.0
        %898 = vmatpush1.msra.mxu0 0.0
        %899 = vmatprep.subr.mxu0 0.0
        %900 = vmatpush1.msra.mxu0 0.0
        %901 = vmatprep.mubr.f32.mxu0 0.0
        %902 = vmatmul.mubr.f32.gmra.mrb[0].mxu0 %v826
        %v903 = vpop.f32.mrb[0].mxu0
        %v904 = vadd.f32 0.0, %v903
        %v905 = vpop.f32.mrb[0].mxu0
        %906 = vmatprep.mubr.f32.mxu0 0.0
        %907 = vmatmul.mubr.f32.gmra.mrb[0].mxu0 %v829
        %v908 = vpop.f32.mrb[0].mxu0
        %v909 = vadd.f32 0.0, %v908
        %v910 = vpop.f32.mrb[0].mxu0
        %911 = vmatprep.mubr.f32.mxu0 0.0
        %912 = vmatmul.mubr.f32.gmra.mrb[0].mxu0 %v832
        %v913 = vpop.f32.mrb[0].mxu0
        %v914 = vadd.f32 0.0, %v913
        %v915 = vpop.f32.mrb[0].mxu0
        %916 = vmatprep.mubr.f32.mxu0 0.0
        %917 = vmatmul.mubr.f32.gmra.mrb[0].mxu0 %v835
        %v918 = vpop.f32.mrb[0].mxu0
        %v919 = vadd.f32 0.0, %v918
        %v920 = vpop.f32.mrb[0].mxu0
        %921 = vdwg.mxu0
        %922 = vmatprep.subr.mxu0 0.0
        %923 = vmatpush1.msra.mxu0 %v797
        %924 = vmatprep.subr.mxu0 0.0
        %925 = vmatpush1.msra.mxu0 %v802
        %926 = vmatprep.subr.mxu0 0.0
        %927 = vmatpush1.msra.mxu0 0.0
        %928 = vmatprep.subr.mxu0 0.0
        %929 = vmatpush1.msra.mxu0 0.0
        %930 = vmatprep.subr.mxu0 0.0
        %931 = vmatpush1.msra.mxu0 0.0
        %932 = vmatprep.subr.mxu0 0.0
        %933 = vmatpush1.msra.mxu0 0.0
        %934 = vmatprep.subr.mxu0 0.0
        %935 = vmatpush1.msra.mxu0 0.0
        %936 = vmatprep.subr.mxu0 0.0
        %937 = vmatpush1.msra.mxu0 0.0
        %938 = vmatprep.subr.mxu0 0.0
        %939 = vmatpush1.msra.mxu0 0.0
        %940 = vmatprep.subr.mxu0 0.0
        %941 = vmatpush1.msra.mxu0 0.0
        %942 = vmatprep.subr.mxu0 0.0
        %943 = vmatpush1.msra.mxu0 0.0
        %944 = vmatprep.subr.mxu0 0.0
        %945 = vmatpush1.msra.mxu0 0.0
        %946 = vmatprep.subr.mxu0 0.0
        %947 = vmatpush1.msra.mxu0 0.0
        %948 = vmatprep.subr.mxu0 0.0
        %949 = vmatpush1.msra.mxu0 0.0
        %950 = vmatprep.subr.mxu0 0.0
        %951 = vmatpush1.msra.mxu0 0.0
        %952 = vmatprep.subr.mxu0 0.0
        %953 = vmatpush1.msra.mxu0 0.0
        %954 = vmatprep.subr.mxu0 0.0
        %955 = vmatpush1.msra.mxu0 0.0
        %956 = vmatprep.subr.mxu0 0.0
        %957 = vmatpush1.msra.mxu0 0.0
        %958 = vmatprep.subr.mxu0 0.0
        %959 = vmatpush1.msra.mxu0 0.0
        %960 = vmatprep.subr.mxu0 0.0
        %961 = vmatpush1.msra.mxu0 0.0
        %962 = vmatprep.subr.mxu0 0.0
        %963 = vmatpush1.msra.mxu0 0.0
        %964 = vmatprep.subr.mxu0 0.0
        %965 = vmatpush1.msra.mxu0 0.0
        %966 = vmatprep.subr.mxu0 0.0
        %967 = vmatpush1.msra.mxu0 0.0
        %968 = vmatprep.subr.mxu0 0.0
        %969 = vmatpush1.msra.mxu0 0.0
        %970 = vmatprep.subr.mxu0 0.0
        %971 = vmatpush1.msra.mxu0 0.0
        %972 = vmatprep.subr.mxu0 0.0
        %973 = vmatpush1.msra.mxu0 0.0
        %974 = vmatprep.subr.mxu0 0.0
        %975 = vmatpush1.msra.mxu0 0.0
        %976 = vmatprep.subr.mxu0 0.0
        %977 = vmatpush1.msra.mxu0 0.0
        %978 = vmatprep.subr.mxu0 0.0
        %979 = vmatpush1.msra.mxu0 0.0
        %980 = vmatprep.subr.mxu0 0.0
        %981 = vmatpush1.msra.mxu0 0.0
        %982 = vmatprep.subr.mxu0 0.0
        %983 = vmatpush1.msra.mxu0 0.0
        %984 = vmatprep.subr.mxu0 0.0
        %985 = vmatpush1.msra.mxu0 0.0
        %986 = vmatprep.mubr.f32.mxu0 0.0
        %987 = vmatmul.mubr.f32.gmra.mrb[0].mxu0 %v826
        %v988 = vpop.f32.mrb[0].mxu0
        %v989 = vadd.f32 0.0, %v988
        %v990 = vpop.f32.mrb[0].mxu0
        %991 = vmatprep.mubr.f32.mxu0 0.0
        %992 = vmatmul.mubr.f32.gmra.mrb[0].mxu0 %v829
        %v993 = vpop.f32.mrb[0].mxu0
        %v994 = vadd.f32 0.0, %v993
        %v995 = vpop.f32.mrb[0].mxu0
        %996 = vmatprep.mubr.f32.mxu0 0.0
        %997 = vmatmul.mubr.f32.gmra.mrb[0].mxu0 %v832
        %v998 = vpop.f32.mrb[0].mxu0
        %v999 = vadd.f32 0.0, %v998
        %v1000 = vpop.f32.mrb[0].mxu0
        %1001 = vmatprep.mubr.f32.mxu0 0.0
        %1002 = vmatmul.mubr.f32.gmra.mrb[0].mxu0 %v835
        %v1003 = vpop.f32.mrb[0].mxu0
        %v1004 = vadd.f32 0.0, %v1003
        %v1005 = vpop.f32.mrb[0].mxu0
        %1006 = vdwg.mxu0
        %1007 = vmatprep.subr.mxu0 0.0
        %1008 = vmatpush1.msra.mxu0 %v807
        %1009 = vmatprep.subr.mxu0 0.0
        %1010 = vmatpush1.msra.mxu0 %v812
        %1011 = vmatprep.subr.mxu0 0.0
        %1012 = vmatpush1.msra.mxu0 0.0
        %1013 = vmatprep.subr.mxu0 0.0
        %1014 = vmatpush1.msra.mxu0 0.0
        %1015 = vmatprep.subr.mxu0 0.0
        %1016 = vmatpush1.msra.mxu0 0.0
        %1017 = vmatprep.subr.mxu0 0.0
        %1018 = vmatpush1.msra.mxu0 0.0
        %1019 = vmatprep.subr.mxu0 0.0
        %1020 = vmatpush1.msra.mxu0 0.0
        %1021 = vmatprep.subr.mxu0 0.0
        %1022 = vmatpush1.msra.mxu0 0.0
        %1023 = vmatprep.subr.mxu0 0.0
        %1024 = vmatpush1.msra.mxu0 0.0
        %1025 = vmatprep.subr.mxu0 0.0
        %1026 = vmatpush1.msra.mxu0 0.0
        %1027 = vmatprep.subr.mxu0 0.0
        %1028 = vmatpush1.msra.mxu0 0.0
        %1029 = vmatprep.subr.mxu0 0.0
        %1030 = vmatpush1.msra.mxu0 0.0
        %1031 = vmatprep.subr.mxu0 0.0
        %1032 = vmatpush1.msra.mxu0 0.0
        %1033 = vmatprep.subr.mxu0 0.0
        %1034 = vmatpush1.msra.mxu0 0.0
        %1035 = vmatprep.subr.mxu0 0.0
        %1036 = vmatpush1.msra.mxu0 0.0
        %1037 = vmatprep.subr.mxu0 0.0
        %1038 = vmatpush1.msra.mxu0 0.0
        %1039 = vmatprep.subr.mxu0 0.0
        %1040 = vmatpush1.msra.mxu0 0.0
        %1041 = vmatprep.subr.mxu0 0.0
        %1042 = vmatpush1.msra.mxu0 0.0
        %1043 = vmatprep.subr.mxu0 0.0
        %1044 = vmatpush1.msra.mxu0 0.0
        %1045 = vmatprep.subr.mxu0 0.0
        %1046 = vmatpush1.msra.mxu0 0.0
        %1047 = vmatprep.subr.mxu0 0.0
        %1048 = vmatpush1.msra.mxu0 0.0
        %1049 = vmatprep.subr.mxu0 0.0
        %1050 = vmatpush1.msra.mxu0 0.0
        %1051 = vmatprep.subr.mxu0 0.0
        %1052 = vmatpush1.msra.mxu0 0.0
        %1053 = vmatprep.subr.mxu0 0.0
        %1054 = vmatpush1.msra.mxu0 0.0
        %1055 = vmatprep.subr.mxu0 0.0
        %1056 = vmatpush1.msra.mxu0 0.0
        %1057 = vmatprep.subr.mxu0 0.0
        %1058 = vmatpush1.msra.mxu0 0.0
        %1059 = vmatprep.subr.mxu0 0.0
        %1060 = vmatpush1.msra.mxu0 0.0
        %1061 = vmatprep.subr.mxu0 0.0
        %1062 = vmatpush1.msra.mxu0 0.0
        %1063 = vmatprep.subr.mxu0 0.0
        %1064 = vmatpush1.msra.mxu0 0.0
        %1065 = vmatprep.subr.mxu0 0.0
        %1066 = vmatpush1.msra.mxu0 0.0
        %1067 = vmatprep.subr.mxu0 0.0
        %1068 = vmatpush1.msra.mxu0 0.0
        %1069 = vmatprep.subr.mxu0 0.0
        %1070 = vmatpush1.msra.mxu0 0.0
        %1071 = vmatprep.mubr.f32.mxu0 0.0
        %1072 = vmatmul.mubr.f32.gmra.mrb[0].mxu0 %v826
        %v1073 = vpop.f32.mrb[0].mxu0
        %v1074 = vadd.f32 0.0, %v1073
        %v1075 = vpop.f32.mrb[0].mxu0
        %1076 = vmatprep.mubr.f32.mxu0 0.0
        %1077 = vmatmul.mubr.f32.gmra.mrb[0].mxu0 %v829
        %v1078 = vpop.f32.mrb[0].mxu0
        %v1079 = vadd.f32 0.0, %v1078
        %v1080 = vpop.f32.mrb[0].mxu0
        %1081 = vmatprep.mubr.f32.mxu0 0.0
        %1082 = vmatmul.mubr.f32.gmra.mrb[0].mxu0 %v832
        %v1083 = vpop.f32.mrb[0].mxu0
        %v1084 = vadd.f32 0.0, %v1083
        %v1085 = vpop.f32.mrb[0].mxu0
        %1086 = vmatprep.mubr.f32.mxu0 0.0
        %1087 = vmatmul.mubr.f32.gmra.mrb[0].mxu0 %v835
        %v1088 = vpop.f32.mrb[0].mxu0
        %v1089 = vadd.f32 0.0, %v1088
        %v1090 = vpop.f32.mrb[0].mxu0
        %1091 = vdwg.mxu0
        %1092 = vmatprep.subr.mxu0 0.0
        %1093 = vmatpush1.msra.mxu0 %v817
        %1094 = vmatprep.subr.mxu0 0.0
        %1095 = vmatpush1.msra.mxu0 %v822
        %1096 = vmatprep.subr.mxu0 0.0
        %1097 = vmatpush1.msra.mxu0 0.0
        %1098 = vmatprep.subr.mxu0 0.0
        %1099 = vmatpush1.msra.mxu0 0.0
        %1100 = vmatprep.subr.mxu0 0.0
        %1101 = vmatpush1.msra.mxu0 0.0
        %1102 = vmatprep.subr.mxu0 0.0
        %1103 = vmatpush1.msra.mxu0 0.0
        %1104 = vmatprep.subr.mxu0 0.0
        %1105 = vmatpush1.msra.mxu0 0.0
        %1106 = vmatprep.subr.mxu0 0.0
        %1107 = vmatpush1.msra.mxu0 0.0
        %1108 = vmatprep.subr.mxu0 0.0
        %1109 = vmatpush1.msra.mxu0 0.0
        %1110 = vmatprep.subr.mxu0 0.0
        %1111 = vmatpush1.msra.mxu0 0.0
        %1112 = vmatprep.subr.mxu0 0.0
        %1113 = vmatpush1.msra.mxu0 0.0
        %1114 = vmatprep.subr.mxu0 0.0
        %1115 = vmatpush1.msra.mxu0 0.0
        %1116 = vmatprep.subr.mxu0 0.0
        %1117 = vmatpush1.msra.mxu0 0.0
        %1118 = vmatprep.subr.mxu0 0.0
        %1119 = vmatpush1.msra.mxu0 0.0
        %1120 = vmatprep.subr.mxu0 0.0
        %1121 = vmatpush1.msra.mxu0 0.0
        %1122 = vmatprep.subr.mxu0 0.0
        %1123 = vmatpush1.msra.mxu0 0.0
        %1124 = vmatprep.subr.mxu0 0.0
        %1125 = vmatpush1.msra.mxu0 0.0
        %1126 = vmatprep.subr.mxu0 0.0
        %1127 = vmatpush1.msra.mxu0 0.0
        %1128 = vmatprep.subr.mxu0 0.0
        %1129 = vmatpush1.msra.mxu0 0.0
        %1130 = vmatprep.subr.mxu0 0.0
        %1131 = vmatpush1.msra.mxu0 0.0
        %1132 = vmatprep.subr.mxu0 0.0
        %1133 = vmatpush1.msra.mxu0 0.0
        %1134 = vmatprep.subr.mxu0 0.0
        %1135 = vmatpush1.msra.mxu0 0.0
        %1136 = vmatprep.subr.mxu0 0.0
        %1137 = vmatpush1.msra.mxu0 0.0
        %1138 = vmatprep.subr.mxu0 0.0
        %1139 = vmatpush1.msra.mxu0 0.0
        %1140 = vmatprep.subr.mxu0 0.0
        %1141 = vmatpush1.msra.mxu0 0.0
        %1142 = vmatprep.subr.mxu0 0.0
        %1143 = vmatpush1.msra.mxu0 0.0
        %1144 = vmatprep.subr.mxu0 0.0
        %1145 = vmatpush1.msra.mxu0 0.0
        %1146 = vmatprep.subr.mxu0 0.0
        %1147 = vmatpush1.msra.mxu0 0.0
        %1148 = vmatprep.subr.mxu0 0.0
        %1149 = vmatpush1.msra.mxu0 0.0
        %1150 = vmatprep.subr.mxu0 0.0
        %1151 = vmatpush1.msra.mxu0 0.0
        %1152 = vmatprep.subr.mxu0 0.0
        %1153 = vmatpush1.msra.mxu0 0.0
        %1154 = vmatprep.subr.mxu0 0.0
        %1155 = vmatpush1.msra.mxu0 0.0
        %1156 = vmatprep.mubr.f32.mxu0 0.0
        %1157 = vmatmul.mubr.f32.gmra.mrb[0].mxu0 %v826
        %v1158 = vpop.f32.mrb[0].mxu0
        %v1159 = vadd.f32 0.0, %v1158
        %v1160 = vpop.f32.mrb[0].mxu0
        %1161 = vmatprep.mubr.f32.mxu0 0.0
        %1162 = vmatmul.mubr.f32.gmra.mrb[0].mxu0 %v829
        %v1163 = vpop.f32.mrb[0].mxu0
        %v1164 = vadd.f32 0.0, %v1163
        %v1165 = vpop.f32.mrb[0].mxu0
        %1166 = vmatprep.mubr.f32.mxu0 0.0
        %1167 = vmatmul.mubr.f32.gmra.mrb[0].mxu0 %v832
        %v1168 = vpop.f32.mrb[0].mxu0
        %v1169 = vadd.f32 0.0, %v1168
        %v1170 = vpop.f32.mrb[0].mxu0
        %1171 = vmatprep.mubr.f32.mxu0 0.0
        %1172 = vmatmul.mubr.f32.gmra.mrb[0].mxu0 %v835
        %v1173 = vpop.f32.mrb[0].mxu0
        %v1174 = vadd.f32 0.0, %v1173
        %v1175 = vpop.f32.mrb[0].mxu0
        %1176 = vdwg.mxu0
        %vm1177 = vcmask 261120
        %1178 = vst.msk [vmem:[%s281] sm:$0xff] %vm1177, %v904
        %1179 = vst.msk [vmem:[%s281 + $0x8] sm:$0xff] %vm1177, %v909
        %1180 = vst.msk [vmem:[%s281 + $0x10] sm:$0xff] %vm1177, %v914
        %1181 = vst.msk [vmem:[%s281 + $0x18] sm:$0xff] %vm1177, %v919
        %1182 = vst.msk [vmem:[%s281 + $0x20] sm:$0xff] %vm1177, %v989
        %1183 = vst.msk [vmem:[%s281 + $0x28] sm:$0xff] %vm1177, %v994
        %1184 = vst.msk [vmem:[%s281 + $0x30] sm:$0xff] %vm1177, %v999
        %1185 = vst.msk [vmem:[%s281 + $0x38] sm:$0xff] %vm1177, %v1004
        %1186 = vst.msk [vmem:[%s281 + $0x40] sm:$0xff] %vm1177, %v1074
        %1187 = vst.msk [vmem:[%s281 + $0x48] sm:$0xff] %vm1177, %v1079
        %1188 = vst.msk [vmem:[%s281 + $0x50] sm:$0xff] %vm1177, %v1084
        %1189 = vst.msk [vmem:[%s281 + $0x58] sm:$0xff] %vm1177, %v1089
        %1190 = vst.msk [vmem:[%s281 + $0x60] sm:$0xff] %vm1177, %v1159
        %1191 = vst.msk [vmem:[%s281 + $0x68] sm:$0xff] %vm1177, %v1164
        %1192 = vst.msk [vmem:[%s281 + $0x70] sm:$0xff] %vm1177, %v1169
        %1193 = vst.msk [vmem:[%s281 + $0x78] sm:$0xff] %vm1177, %v1174
        %s1194 = sand.u32 %s145, 1
        %s1195 = scalar_lea.sflag [#allocation4], %s1194
        %s1196 = sand.u32 %s145, 1
        %s1197 = smul.addr %s1196, 32
        %s1198 = scalar_lea.vmem [#allocation5], %s1197
        %s1199 = sand.u32 %s171, 1
        %s1200 = scalar_lea.sflag [#allocation7], %s1199
        %s1201 = sand.u32 %s171, 1
        %s1202 = smul.addr %s1201, 128
        %s1203 = scalar_lea.vmem [#allocation6], %s1202
        // Predicated region
        $region45: #{tpu_custom_call.1} parent=39 // pred_check
          %p1204 = pneg %p155
        $region46: #{tpu_custom_call.1} parent=39 // pred_check_branch
          %1206 = sbr.rel (%p1204) target = $region48
        $region47: #{tpu_custom_call.1} parent=39 // pred_region
          %s1207 = smul.u32 4, %s27
          %s1209 = ssub.s32 512, 512
          %1210 = vsyncadd %s1195, %s1209
          %s1211 = smul.addr %s1207, 128
          %s1212 = scalar_lea.hbm %s5, %s1211
          %s1213 = sshll.u32 %s1198, 4
          %s1214 = int_to_ptr.vmem [resolvable:$true] %s1213
          %1219 = dma.vmem_to_hbm [thread:$0]  %s1214, 512, %s1212, %s1195, 128, 128, 8
        $region48: #{tpu_custom_call.1} parent=39 // pred_fallthru
          _
        // Predicated region
        $region49: #{tpu_custom_call.1} parent=39 // pred_check
          %p1220 = pneg %p181
        $region50: #{tpu_custom_call.1} parent=39 // pred_check_branch
          %1222 = sbr.rel (%p1220) target = $region52
        $region51: #{tpu_custom_call.1} parent=39 // pred_region
          %s1223 = smul.u32 4, %s27
          %s1225 = ssub.s32 2048, 2048
          %1226 = vsyncadd %s1200, %s1225
          %s1227 = smul.addr %s1223, 4
          %s1228 = smul.addr %s1227, 128
          %s1229 = scalar_lea.hbm %s6, %s1228
          %s1230 = sshll.u32 %s1203, 4
          %s1231 = int_to_ptr.vmem [resolvable:$true] %s1230
          %1236 = dma.vmem_to_hbm [thread:$0]  %s1231, 2048, %s1229, %s1200, 128, 128, 8
        $region52: #{tpu_custom_call.1} parent=39 // pred_fallthru
          _
      $region40: #{tpu_custom_call.1} parent=5 // pred_fallthru
        _
      %p1237 = scmp.le.s32.totalorder 2, %s22
      // Predicated region
      $region53: #{tpu_custom_call.1} parent=5 // pred_check
        %p1238 = pneg %p1237
      $region54: #{tpu_custom_call.1} parent=5 // pred_check_branch
        %1240 = sbr.rel (%p1238) target = $region56
      $region55: #{tpu_custom_call.1} parent=5 // pred_region
        %s1241 = ssub.s32 %s22, 2
        // Predicated region
        $region57: #{tpu_custom_call.1} parent=55 // pred_check
          %p1242 = pneg %p161
        $region58: #{tpu_custom_call.1} parent=55 // pred_check_branch
          %1244 = sbr.rel (%p1242) target = $region60
        $region59: #{tpu_custom_call.1} parent=55 // pred_region
          %s1245 = sand.u32 %s146, 1
          %s1246 = scalar_lea.sflag [#allocation4], %s1245
          %s1247 = sand.u32 %s146, 1
          %s1248 = smul.addr %s1247, 32
          %s1249 = scalar_lea.vmem [#allocation5], %s1248
          %1250 = dma.done %s1246, 512
        $region60: #{tpu_custom_call.1} parent=55 // pred_fallthru
          _
        // Predicated region
        $region61: #{tpu_custom_call.1} parent=55 // pred_check
          %p1251 = pneg %p187
        $region62: #{tpu_custom_call.1} parent=55 // pred_check_branch
          %1253 = sbr.rel (%p1251) target = $region64
        $region63: #{tpu_custom_call.1} parent=55 // pred_region
          %s1254 = sand.u32 %s172, 1
          %s1255 = scalar_lea.sflag [#allocation7], %s1254
          %s1256 = sand.u32 %s172, 1
          %s1257 = smul.addr %s1256, 128
          %s1258 = scalar_lea.vmem [#allocation6], %s1257
          %1259 = dma.done %s1255, 2048
        $region64: #{tpu_custom_call.1} parent=55 // pred_fallthru
          _
      $region56: #{tpu_custom_call.1} parent=5 // pred_fallthru
        _
    $region6: #{tpu_custom_call.1} parent=1 // loop_footer
      %s26 = sadd.s32 1, %s22
    $region7: #{tpu_custom_call.1} parent=1 // loop_footer_branch
      %21 = sbr.rel target = $region3
    $region8: #{tpu_custom_call.1} parent=1 // loop_exit
      _
    %1260 = vsyncpa [#allocation3], 1
    %s1261 = scalar_lea.sflag [#allocation3], 1
    %1262 = vsyncpa %s1261, 1
    %1263 = vsyncpa [#allocation4], 1
    %s1264 = scalar_lea.sflag [#allocation4], 1
    %1265 = vsyncpa %s1264, 1
    %1266 = vsyncpa [#allocation7], 1
    %s1267 = scalar_lea.sflag [#allocation7], 1
    %1268 = vsyncpa %s1267, 1

</llo_original>
